<compile_context>
chip_gen: v7x
topology: tpu7x:2x2x1
jax: 0.10.0
libtpu: 0.0.40
codegen_flags: <defaults>
</compile_context>

<pallas_src>
import jax
import jax.numpy as jnp
from jax.experimental import pallas as pl
from jax.experimental.pallas import tpu as pltpu

N_STATES = 2
N_ACTIONS = 1          # kernel specializes the final layer / action path to 1
HIDDEN = 32
SLAB_COLS = 40         # 32 weight columns + 1 bias column, small pad


def _critic_kernel(states_ref, actions_ref, w_ref, out_ref):
    """One batch tile of the fused 3->32->32->32->1 MLP (batch on lanes).

    w_ref layout (4, HIDDEN, SLAB_COLS), f32 (all weights pre-transposed):
      [0, :, 0:2]   = W1.T state columns   (32, 2)
      [0, :, 2:3]   = W1.T action column   (32, 1)
      [0, :, 32]    = b1                   (32,)
      [1, :, 0:32]  = W2.T ; [1, :, 32] = b2
      [2, :, 0:32]  = W3.T ; [2, :, 32] = b3
      [3, :, 0]     = W4 as a column       (32,)
      [3, 0, 32]    = b4 (scalar)
    """
    s = states_ref[...]                                   # (2, tb)
    a = actions_ref[...]                                  # (1, tb)

    # Layer 1: K=3 contraction on the VPU as (32,1)x(1,tb) broadcast mul-adds
    # (avoids MXU push/pop latency for a 3-deep contraction).
    h = (w_ref[0, :, 0:1] * s[0:1, :]
         + w_ref[0, :, 1:2] * s[1:2, :]
         + w_ref[0, :, 2:3] * a
         + w_ref[0, :, HIDDEN:HIDDEN + 1])                # (32, tb)
    h = jnp.maximum(h, 0.0)

    # Layers 2 & 3: (32,32) x (32,tb) MXU matmuls, lane-dense on the batch.
    h = jnp.maximum(
        jnp.dot(w_ref[1, :, 0:HIDDEN], h, preferred_element_type=jnp.float32)
        + w_ref[1, :, HIDDEN:HIDDEN + 1], 0.0)
    h = jnp.maximum(
        jnp.dot(w_ref[2, :, 0:HIDDEN], h, preferred_element_type=jnp.float32)
        + w_ref[2, :, HIDDEN:HIDDEN + 1], 0.0)

    # Layer 4 (out_features == 1): VPU multiply + sublane reduce -> (1, tb).
    q = (jnp.sum(w_ref[3, :, 0:1] * h, axis=0, keepdims=True)
         + w_ref[3, 0:1, HIDDEN:HIDDEN + 1])              # (1, tb)
    out_ref[...] = q.astype(out_ref.dtype)


def pack_params(params):
    """Pack the 4 (W, b) pairs into one (4, HIDDEN, SLAB_COLS) f32 slab,
    pre-transposed into the orientation the kernel consumes."""
    (w1, b1), (w2, b2), (w3, b3), (w4, b4) = params
    assert N_ACTIONS == 1, "kernel specializes the final layer to n_actions == 1"
    slab = jnp.zeros((4, HIDDEN, SLAB_COLS), jnp.float32)
    slab = slab.at[0, :, :N_STATES + N_ACTIONS].set(w1.T)   # (32, 3)
    slab = slab.at[0, :, HIDDEN].set(b1.reshape(-1))
    slab = slab.at[1, :, :HIDDEN].set(w2.T)
    slab = slab.at[1, :, HIDDEN].set(b2.reshape(-1))
    slab = slab.at[2, :, :HIDDEN].set(w3.T)
    slab = slab.at[2, :, HIDDEN].set(b3.reshape(-1))
    slab = slab.at[3, :, 0].set(w4.reshape(-1))             # W4 as a column
    slab = slab.at[3, 0, HIDDEN].set(b4.reshape(-1)[0])
    return slab


def critic_forward(states, actions, param_slab, *, tile_b=2048):
    """states: (B, 2) f32; actions: (B, 1) f32 -> (B, 1) f32."""
    states = states.astype(jnp.float32)
    actions = actions.astype(jnp.float32)
    batch = states.shape[0]

    # Lane-dense tiling: batch lives on the lane axis, tiles are multiples of
    # 128 (or the single padded tile). Round/validate caller-provided tile_b.
    tb = max(128, (int(tile_b) // 128) * 128)
    n_lane_groups = pl.cdiv(batch, 128)
    tb = min(tb, n_lane_groups * 128)                  # don't over-pad tiny batches
    if n_lane_groups >= 2:
        # Guarantee grid >= 2 so v7x's second TensorCore is used.
        tb = min(tb, pl.cdiv(n_lane_groups, 2) * 128)
    b_pad = pl.cdiv(batch, tb) * tb
    grid = b_pad // tb

    # Feature-major inputs (2, B) / (1, B); pad the batch (padded rows are
    # independent garbage and sliced off below).
    states_t = states.T
    actions_t = actions.T
    if b_pad != batch:
        pad = b_pad - batch
        states_t = jnp.pad(states_t, ((0, 0), (0, pad)))
        actions_t = jnp.pad(actions_t, ((0, 0), (0, pad)))

    out = pl.pallas_call(
        _critic_kernel,
        out_shape=jax.ShapeDtypeStruct((N_ACTIONS, b_pad), jnp.float32),
        grid=(grid,),
        in_specs=[
            pl.BlockSpec((N_STATES, tb), lambda i: (0, i)),
            pl.BlockSpec((N_ACTIONS, tb), lambda i: (0, i)),
            # constant index_map -> weight slab stays VMEM-resident across tiles
            pl.BlockSpec((4, HIDDEN, SLAB_COLS), lambda i: (0, 0, 0)),
        ],
        out_specs=pl.BlockSpec((N_ACTIONS, tb), lambda i: (0, i)),
        compiler_params=pltpu.CompilerParams(
            dimension_semantics=("parallel",)),
    )(states_t, actions_t, param_slab)

    # (1, b_pad) -> (b_pad, 1) is a free row-major reshape; slice off padding.
    out = out.reshape(b_pad, N_ACTIONS)
    return out[:batch] if b_pad != batch else out


def init_params(key):
    """Deterministic init mimicking nn.Linear (uniform +-1/sqrt(fan_in))."""
    dims = [(N_STATES + N_ACTIONS, HIDDEN), (HIDDEN, HIDDEN),
            (HIDDEN, HIDDEN), (HIDDEN, N_ACTIONS)]
    params = []
    for (fan_in, fan_out) in dims:
        key, kw, kb = jax.random.split(key, 3)
        bound = 1.0 / jnp.sqrt(jnp.float32(fan_in))
        w = jax.random.uniform(kw, (fan_in, fan_out), jnp.float32, -bound, bound)
        b = jax.random.uniform(kb, (1, fan_out), jnp.float32, -bound, bound)
        params.append((w, b))
    return params


def critic_ref(states, actions, params):
    """Pure-JAX reference matching the PyTorch module."""
    x = jnp.concatenate([states, actions], axis=1)
    (w1, b1), (w2, b2), (w3, b3), (w4, b4) = params
    h = jnp.maximum(x @ w1 + b1, 0.0)
    h = jnp.maximum(h @ w2 + b2, 0.0)
    h = jnp.maximum(h @ w3 + b3, 0.0)
    return h @ w4 + b4


if __name__ == "__main__":
    key = jax.random.PRNGKey(0)
    kp, ks, ka, ks2, ka2 = jax.random.split(key, 5)

    params = init_params(kp)
    slab = pack_params(params)

    # Small inference-style batch (single padded tile path).
    batch = 8
    states = jax.random.normal(ks, (batch, N_STATES), jnp.float32)
    actions = jax.random.normal(ka, (batch, N_ACTIONS), jnp.float32)
    q = jax.block_until_ready(critic_forward(states, actions, slab))
    q_ref = critic_ref(states, actions, params)
    assert q.shape == (batch, N_ACTIONS)
    assert jnp.allclose(q, q_ref, atol=1e-5, rtol=1e-5), "mismatch (B=8)"

    # Training-style batch exercising the tiled grid (>=2 tiles) + padding path.
    batch2 = 1000
    states2 = jax.random.normal(ks2, (batch2, N_STATES), jnp.float32)
    actions2 = jax.random.normal(ka2, (batch2, N_ACTIONS), jnp.float32)
    q2 = jax.block_until_ready(critic_forward(states2, actions2, slab))
    q2_ref = critic_ref(states2, actions2, params)
    assert q2.shape == (batch2, N_ACTIONS)
    assert jnp.allclose(q2, q2_ref, atol=1e-5, rtol=1e-5), "mismatch (B=1000)"

    print("KERNEL_OK")
</pallas_src>

<mosaic_0001>
module attributes {stable_mosaic.version = 11 : i64} {
  func.func @_critic_kernel(%arg0: i32, %arg1: memref<2x128xf32, #tpu.memory_space<vmem>>, %arg2: memref<1x128xf32, #tpu.memory_space<vmem>>, %arg3: memref<4x32x40xf32, #tpu.memory_space<vmem>>, %arg4: memref<1x128xf32, #tpu.memory_space<vmem>>) attributes {dimension_semantics = [#tpu.dimension_semantics<parallel>], iteration_bounds = array<i64: 1>, scalar_prefetch = 0 : i64, scratch_operands = 0 : i64, tpu.core_type = #tpu.core_type<tc>, window_params = [{transform_indices = @transform_0, window_bounds = array<i64: 2, 128>}, {transform_indices = @transform_1, window_bounds = array<i64: 1, 128>}, {pipeline_mode = #tpu.pipeline_mode<synchronous>, transform_indices = @transform_2, window_bounds = array<i64: 4, 32, 40>}, {transform_indices = @transform_3, window_bounds = array<i64: 1, 128>}]} {
    %c0 = arith.constant 0 : index
    %c0_0 = arith.constant 0 : index
    %0 = vector.load %arg1[%c0, %c0_0] : memref<2x128xf32, #tpu.memory_space<vmem>>, vector<2x128xf32>
    %c0_1 = arith.constant 0 : index
    %c0_2 = arith.constant 0 : index
    %1 = vector.load %arg2[%c0_1, %c0_2] : memref<1x128xf32, #tpu.memory_space<vmem>>, vector<1x128xf32>
    %c0_3 = arith.constant 0 : index
    %c0_4 = arith.constant 0 : index
    %c0_5 = arith.constant 0 : index
    %2 = vector.load %arg3[%c0_3, %c0_4, %c0_5] : memref<4x32x40xf32, #tpu.memory_space<vmem>>, vector<1x32x1xf32>
    %3 = vector.shape_cast %2 : vector<1x32x1xf32> to vector<32x1xf32>
    %4 = vector.extract_strided_slice %0 {offsets = [0, 0], sizes = [1, 128], strides = [1, 1]} : vector<2x128xf32> to vector<1x128xf32>
    %5 = vector.broadcast %3 : vector<32x1xf32> to vector<32x128xf32>
    %6 = vector.broadcast %4 : vector<1x128xf32> to vector<32x128xf32>
    %7 = arith.mulf %5, %6 : vector<32x128xf32>
    %c0_6 = arith.constant 0 : index
    %c0_7 = arith.constant 0 : index
    %c1 = arith.constant 1 : index
    %8 = vector.load %arg3[%c0_6, %c0_7, %c1] : memref<4x32x40xf32, #tpu.memory_space<vmem>>, vector<1x32x1xf32>
    %9 = vector.shape_cast %8 : vector<1x32x1xf32> to vector<32x1xf32>
    %10 = vector.extract_strided_slice %0 {offsets = [1, 0], sizes = [1, 128], strides = [1, 1]} : vector<2x128xf32> to vector<1x128xf32>
    %11 = vector.broadcast %9 : vector<32x1xf32> to vector<32x128xf32>
    %12 = vector.broadcast %10 : vector<1x128xf32> to vector<32x128xf32>
    %13 = arith.mulf %11, %12 : vector<32x128xf32>
    %14 = arith.addf %7, %13 : vector<32x128xf32>
    %c0_8 = arith.constant 0 : index
    %c0_9 = arith.constant 0 : index
    %c2 = arith.constant 2 : index
    %15 = vector.load %arg3[%c0_8, %c0_9, %c2] : memref<4x32x40xf32, #tpu.memory_space<vmem>>, vector<1x32x1xf32>
    %16 = vector.shape_cast %15 : vector<1x32x1xf32> to vector<32x1xf32>
    %17 = vector.broadcast %16 : vector<32x1xf32> to vector<32x128xf32>
    %18 = vector.broadcast %1 : vector<1x128xf32> to vector<32x128xf32>
    %19 = arith.mulf %17, %18 : vector<32x128xf32>
    %20 = arith.addf %14, %19 : vector<32x128xf32>
    %c0_10 = arith.constant 0 : index
    %c0_11 = arith.constant 0 : index
    %c32 = arith.constant 32 : index
    %21 = vector.load %arg3[%c0_10, %c0_11, %c32] : memref<4x32x40xf32, #tpu.memory_space<vmem>>, vector<1x32x1xf32>
    %22 = vector.shape_cast %21 : vector<1x32x1xf32> to vector<32x1xf32>
    %23 = vector.broadcast %22 : vector<32x1xf32> to vector<32x128xf32>
    %24 = arith.addf %20, %23 : vector<32x128xf32>
    %cst = arith.constant 0.000000e+00 : f32
    %25 = vector.broadcast %cst : f32 to vector<32x128xf32>
    %26 = arith.maximumf %24, %25 : vector<32x128xf32>
    %c1_12 = arith.constant 1 : index
    %c0_13 = arith.constant 0 : index
    %c0_14 = arith.constant 0 : index
    %27 = vector.load %arg3[%c1_12, %c0_13, %c0_14] : memref<4x32x40xf32, #tpu.memory_space<vmem>>, vector<1x32x32xf32>
    %28 = vector.shape_cast %27 : vector<1x32x32xf32> to vector<32x32xf32>
    %cst_15 = arith.constant dense<0.000000e+00> : vector<32x128xf32>
    %29 = tpu.matmul %28, %26, %cst_15 {dimension_numbers = #tpu.dot_dimension_numbers<[1], [0], [0], [1], [0, 0, 1, 1], [], []>} : vector<32x32xf32>, vector<32x128xf32>, vector<32x128xf32> -> vector<32x128xf32>
    %c1_16 = arith.constant 1 : index
    %c0_17 = arith.constant 0 : index
    %c32_18 = arith.constant 32 : index
    %30 = vector.load %arg3[%c1_16, %c0_17, %c32_18] : memref<4x32x40xf32, #tpu.memory_space<vmem>>, vector<1x32x1xf32>
    %31 = vector.shape_cast %30 : vector<1x32x1xf32> to vector<32x1xf32>
    %32 = vector.broadcast %31 : vector<32x1xf32> to vector<32x128xf32>
    %33 = arith.addf %29, %32 : vector<32x128xf32>
    %cst_19 = arith.constant 0.000000e+00 : f32
    %34 = vector.broadcast %cst_19 : f32 to vector<32x128xf32>
    %35 = arith.maximumf %33, %34 : vector<32x128xf32>
    %c2_20 = arith.constant 2 : index
    %c0_21 = arith.constant 0 : index
    %c0_22 = arith.constant 0 : index
    %36 = vector.load %arg3[%c2_20, %c0_21, %c0_22] : memref<4x32x40xf32, #tpu.memory_space<vmem>>, vector<1x32x32xf32>
    %37 = vector.shape_cast %36 : vector<1x32x32xf32> to vector<32x32xf32>
    %cst_23 = arith.constant dense<0.000000e+00> : vector<32x128xf32>
    %38 = tpu.matmul %37, %35, %cst_23 {dimension_numbers = #tpu.dot_dimension_numbers<[1], [0], [0], [1], [0, 0, 1, 1], [], []>} : vector<32x32xf32>, vector<32x128xf32>, vector<32x128xf32> -> vector<32x128xf32>
    %c2_24 = arith.constant 2 : index
    %c0_25 = arith.constant 0 : index
    %c32_26 = arith.constant 32 : index
    %39 = vector.load %arg3[%c2_24, %c0_25, %c32_26] : memref<4x32x40xf32, #tpu.memory_space<vmem>>, vector<1x32x1xf32>
    %40 = vector.shape_cast %39 : vector<1x32x1xf32> to vector<32x1xf32>
    %41 = vector.broadcast %40 : vector<32x1xf32> to vector<32x128xf32>
    %42 = arith.addf %38, %41 : vector<32x128xf32>
    %cst_27 = arith.constant 0.000000e+00 : f32
    %43 = vector.broadcast %cst_27 : f32 to vector<32x128xf32>
    %44 = arith.maximumf %42, %43 : vector<32x128xf32>
    %c3 = arith.constant 3 : index
    %c0_28 = arith.constant 0 : index
    %c0_29 = arith.constant 0 : index
    %45 = vector.load %arg3[%c3, %c0_28, %c0_29] : memref<4x32x40xf32, #tpu.memory_space<vmem>>, vector<1x32x1xf32>
    %46 = vector.shape_cast %45 : vector<1x32x1xf32> to vector<32x1xf32>
    %47 = vector.broadcast %46 : vector<32x1xf32> to vector<32x128xf32>
    %48 = arith.mulf %47, %44 : vector<32x128xf32>
    %cst_30 = arith.constant dense<0.000000e+00> : vector<128xf32>
    %49 = vector.multi_reduction <add>, %48, %cst_30 [0] : vector<32x128xf32> to vector<128xf32>
    %50 = vector.shape_cast %49 : vector<128xf32> to vector<1x128xf32>
    %c3_31 = arith.constant 3 : index
    %c0_32 = arith.constant 0 : index
    %c32_33 = arith.constant 32 : index
    %51 = vector.load %arg3[%c3_31, %c0_32, %c32_33] : memref<4x32x40xf32, #tpu.memory_space<vmem>>, vector<1x1x1xf32>
    %52 = vector.shape_cast %51 : vector<1x1x1xf32> to vector<1x1xf32>
    %53 = vector.broadcast %52 : vector<1x1xf32> to vector<1x128xf32>
    %54 = arith.addf %50, %53 : vector<1x128xf32>
    %c0_34 = arith.constant 0 : index
    %c0_35 = arith.constant 0 : index
    %55 = vector.load %arg4[%c0_34, %c0_35] : memref<1x128xf32, #tpu.memory_space<vmem>>, vector<1x128xf32>
    tpu.vector_store %arg4[%c0_34, %c0_35], %54 {strides = array<i32>} : memref<1x128xf32, #tpu.memory_space<vmem>>, vector<1x128xf32>,
    return
  }
  func.func @transform_0(%arg0: i32) -> (i32, i32) {
    %c0_i32 = arith.constant 0 : i32
    %c0_i32_0 = arith.constant 0 : i32
    return %c0_i32, %arg0 : i32, i32
  }
  func.func @transform_1(%arg0: i32) -> (i32, i32) {
    %c0_i32 = arith.constant 0 : i32
    %c0_i32_0 = arith.constant 0 : i32
    return %c0_i32, %arg0 : i32, i32
  }
  func.func @transform_2(%arg0: i32) -> (i32, i32, i32) {
    %c0_i32 = arith.constant 0 : i32
    %c0_i32_0 = arith.constant 0 : i32
    %c0_i32_1 = arith.constant 0 : i32
    %c0_i32_2 = arith.constant 0 : i32
    return %c0_i32, %c0_i32_0, %c0_i32_1 : i32, i32, i32
  }
  func.func @transform_3(%arg0: i32) -> (i32, i32) {
    %c0_i32 = arith.constant 0 : i32
    %c0_i32_0 = arith.constant 0 : i32
    return %c0_i32, %arg0 : i32, i32
  }
}

</mosaic_0001>

<llo_original>
// kernel: tpu_custom_call.1
$region0: #{tpu_custom_call.1}
  #allocation0 [shape = 'u32[]', space=smem, size = 0x4, offset = 0x4, fixed_abs, tag = 'smem constant byte address 0x4 - core index']
  #allocation1 [shape = 'u32[144,128]{1,0:T(1,128)}', space=vmem, size = 0x12000, scoped, tag = 'internal scratch']
  %s0 = inlined_call_operand.hbm [shape: f32[2,128], index: 0, kind: input, shape index: {}]
  %s1 = inlined_call_operand.vmem [shape: f32[1,128], index: 1, kind: input, shape index: {}]
  %s2 = inlined_call_operand.hbm [shape: f32[4,32,40], index: 2, kind: input, shape index: {}]
  %s3 = inlined_call_operand.hbm [shape: f32[1,128], index: 3, kind: output, shape index: {}]
  %s4 = sld [smem:[#allocation0]]
  $region30: #{tpu_custom_call.1} parent=0
    _
  %s6 = ssub.s32 1, %s4
  %s7 = scalar_select 0, %s6, %s4
  $region1: #{tpu_custom_call.1} parent=0
    #allocation2 [shape = 'u8[1024]{0}', space=vmem, size = 0x400, scoped, tag = 'input window, operand 0, single buffered']
    #allocation3 [shape = 's32[1]{0}', space=sflag, size = 0x4, scoped, tag = 'scoped memory for tpu_custom_call.1']
    #allocation4 [shape = 's32[1]{0}', space=sflag, size = 0x4, scoped, tag = 'scoped memory for tpu_custom_call.1']
    #allocation5 [shape = 'u8[65536]{0}', space=vmem, size = 0x10000, scoped, tag = 'input window, operand 2, single buffered']
    #allocation6 [shape = 's32[1]{0}', space=sflag, size = 0x4, scoped, tag = 'scoped memory for tpu_custom_call.1']
    #allocation7 [shape = 'u8[512]{0}', space=vmem, size = 0x400, scoped, tag = 'output window, operand 0, single buffered']
    %8 = vsyncpa [#allocation3], 0
    %9 = vsyncpa [#allocation6], 0
    %10 = vsyncpa [#allocation4], 0
    // Predicated region
    $region2: #{tpu_custom_call.1} parent=1 // pred_check
      _
    $region3: #{tpu_custom_call.1} parent=1 // pred_check_branch
      %12 = sbr.rel (0) target = $region5
    $region4: #{tpu_custom_call.1} parent=1 // pred_region
      %s14 = ssub.s32 32, 32
      %15 = vsyncadd [#allocation3], %s14
      %s17 = sshll.u32 [#allocation2], 4
      %s18 = int_to_ptr.vmem [resolvable:$true] %s17
      %20 = dma.hbm_to_vmem [thread:$0]  %s0, 32, %s18, [#allocation3]
    $region5: #{tpu_custom_call.1} parent=1 // pred_fallthru
      _
    // Predicated region
    $region6: #{tpu_custom_call.1} parent=1 // pred_check
      _
    $region7: #{tpu_custom_call.1} parent=1 // pred_check_branch
      %22 = sbr.rel (0) target = $region9
    $region8: #{tpu_custom_call.1} parent=1 // pred_region
      _
    $region9: #{tpu_custom_call.1} parent=1 // pred_fallthru
      _
    // Predicated region
    $region10: #{tpu_custom_call.1} parent=1 // pred_check
      _
    $region11: #{tpu_custom_call.1} parent=1 // pred_check_branch
      %24 = sbr.rel (0) target = $region13
    $region12: #{tpu_custom_call.1} parent=1 // pred_region
      %s26 = ssub.s32 2048, 2048
      %27 = vsyncadd [#allocation6], %s26
      %s28 = sshll.u32 [#allocation5], 4
      %s29 = int_to_ptr.vmem [resolvable:$true] %s28
      %34 = dma.hbm_to_vmem [thread:$0]  %s2, 2048, %s29, [#allocation6], 128, 128, 8
    $region13: #{tpu_custom_call.1} parent=1 // pred_fallthru
      _
    // Predicated region
    $region14: #{tpu_custom_call.1} parent=1 // pred_check
      _
    $region15: #{tpu_custom_call.1} parent=1 // pred_check_branch
      %36 = sbr.rel (0) target = $region17
    $region16: #{tpu_custom_call.1} parent=1 // pred_region
      %37 = dma.done [#allocation3], 32
    $region17: #{tpu_custom_call.1} parent=1 // pred_fallthru
      _
    // Predicated region
    $region18: #{tpu_custom_call.1} parent=1 // pred_check
      _
    $region19: #{tpu_custom_call.1} parent=1 // pred_check_branch
      %39 = sbr.rel (0) target = $region21
    $region20: #{tpu_custom_call.1} parent=1 // pred_region
      %40 = dma.done [#allocation6], 2048
    $region21: #{tpu_custom_call.1} parent=1 // pred_fallthru
      _
    %v41 = vld [vmem:[#allocation2] sm:$0x3]
    %v42 = vld [vmem:[%s1] sm:$0x1]
    %v43 = vld [vmem:[#allocation5] sm:$0xff]
    %v44 = vld [vmem:[#allocation5 + $0x8] sm:$0xff]
    %v45 = vld [vmem:[#allocation5 + $0x10] sm:$0xff]
    %v46 = vld [vmem:[#allocation5 + $0x18] sm:$0xff]
    %48 = vset.pattern.permute.xlu0 0
    %49 = vperm.xlu0 %48, %v43
    %v50 = vpop.permute.xlu0 %49
    %53 = vset.pattern.permute.xlu0 0
    %54 = vperm.xlu0 %53, %v44
    %v55 = vpop.permute.xlu0 %54
    %58 = vset.pattern.permute.xlu0 0
    %59 = vperm.xlu0 %58, %v45
    %v60 = vpop.permute.xlu0 %59
    %63 = vset.pattern.permute.xlu0 0
    %64 = vperm.xlu0 %63, %v46
    %v65 = vpop.permute.xlu0 %64
    %v67 = vlaneseq
    %v68 = vshrl.u32 %v67, 7
    %v69 = vsub.s32 0, %v68
    %v70 = vrot.slane %v41, %v69
    %v71 = vmul.f32 %v50, %v70
    %v72 = vmul.f32 %v55, %v70
    %v73 = vmul.f32 %v60, %v70
    %v74 = vmul.f32 %v65, %v70
    %75 = vset.pattern.permute.xlu0 1
    %76 = vperm.xlu0 %75, %v43
    %v77 = vpop.permute.xlu0 %76
    %79 = vset.pattern.permute.xlu0 1
    %80 = vperm.xlu0 %79, %v44
    %v81 = vpop.permute.xlu0 %80
    %83 = vset.pattern.permute.xlu0 1
    %84 = vperm.xlu0 %83, %v45
    %v85 = vpop.permute.xlu0 %84
    %87 = vset.pattern.permute.xlu0 1
    %88 = vperm.xlu0 %87, %v46
    %v89 = vpop.permute.xlu0 %88
    %v91 = vlaneseq
    %v92 = vshrl.u32 %v91, 7
    %v93 = vsub.s32 1, %v92
    %v94 = vrot.slane %v41, %v93
    %v95 = vmul.f32 %v77, %v94
    %v96 = vmul.f32 %v81, %v94
    %v97 = vmul.f32 %v85, %v94
    %v98 = vmul.f32 %v89, %v94
    %v99 = vadd.f32 %v71, %v95
    %v100 = vadd.f32 %v72, %v96
    %v101 = vadd.f32 %v73, %v97
    %v102 = vadd.f32 %v74, %v98
    %103 = vset.pattern.permute.xlu0 2
    %104 = vperm.xlu0 %103, %v43
    %v105 = vpop.permute.xlu0 %104
    %107 = vset.pattern.permute.xlu0 2
    %108 = vperm.xlu0 %107, %v44
    %v109 = vpop.permute.xlu0 %108
    %111 = vset.pattern.permute.xlu0 2
    %112 = vperm.xlu0 %111, %v45
    %v113 = vpop.permute.xlu0 %112
    %115 = vset.pattern.permute.xlu0 2
    %116 = vperm.xlu0 %115, %v46
    %v117 = vpop.permute.xlu0 %116
    %v120 = vlaneseq
    %v121 = vshrl.u32 %v120, 7
    %v122 = vsub.s32 0, %v121
    %v123 = vrot.slane %v42, %v122
    %v125 = vmul.f32 %v105, %v123
    %v126 = vmul.f32 %v109, %v123
    %v127 = vmul.f32 %v113, %v123
    %v128 = vmul.f32 %v117, %v123
    %v129 = vadd.f32 %v99, %v125
    %v130 = vadd.f32 %v100, %v126
    %v131 = vadd.f32 %v101, %v127
    %v132 = vadd.f32 %v102, %v128
    %133 = vset.pattern.permute.xlu0 32
    %134 = vperm.xlu0 %133, %v43
    %v135 = vpop.permute.xlu0 %134
    %137 = vset.pattern.permute.xlu0 32
    %138 = vperm.xlu0 %137, %v44
    %v139 = vpop.permute.xlu0 %138
    %141 = vset.pattern.permute.xlu0 32
    %142 = vperm.xlu0 %141, %v45
    %v143 = vpop.permute.xlu0 %142
    %145 = vset.pattern.permute.xlu0 32
    %146 = vperm.xlu0 %145, %v46
    %v147 = vpop.permute.xlu0 %146
    %v149 = vadd.f32 %v129, %v135
    %v150 = vadd.f32 %v130, %v139
    %v151 = vadd.f32 %v131, %v143
    %v152 = vadd.f32 %v132, %v147
    %v153 = vmax.f32 %v149, 0.0
    %v154 = vmax.f32 %v150, 0.0
    %v155 = vmax.f32 %v151, 0.0
    %v156 = vmax.f32 %v152, 0.0
    %s157 = scalar_lea.vmem [#allocation5], 32
    %v158 = vld [vmem:[%s157] sm:$0xff]
    %v159 = vld [vmem:[%s157 + $0x8] sm:$0xff]
    %v160 = vld [vmem:[%s157 + $0x10] sm:$0xff]
    %v161 = vld [vmem:[%s157 + $0x18] sm:$0xff]
    %163 = vset.pattern.permute.xlu0 32
    %164 = vperm.xlu0 %163, %v158
    %v165 = vpop.permute.xlu0 %164
    %168 = vset.pattern.permute.xlu0 32
    %169 = vperm.xlu0 %168, %v159
    %v170 = vpop.permute.xlu0 %169
    %173 = vset.pattern.permute.xlu0 32
    %174 = vperm.xlu0 %173, %v160
    %v175 = vpop.permute.xlu0 %174
    %178 = vset.pattern.permute.xlu0 32
    %179 = vperm.xlu0 %178, %v161
    %v180 = vpop.permute.xlu0 %179
    %vm182 = vcmask 261120
    %v183 = vsel %vm182, %v158, 0
    %v185 = vsel %vm182, %v159, 0
    %v187 = vsel %vm182, %v160, 0
    %v189 = vsel %vm182, %v161, 0
    %191 = vmatprep.subr.mxu0 0.0
    %192 = vmatpush1.msra.mxu0 %v153
    %193 = vmatprep.subr.mxu0 0.0
    %194 = vmatpush1.msra.mxu0 %v154
    %195 = vmatprep.subr.mxu0 0.0
    %196 = vmatpush1.msra.mxu0 %v155
    %197 = vmatprep.subr.mxu0 0.0
    %198 = vmatpush1.msra.mxu0 %v156
    %199 = vmatprep.subr.mxu0 0.0
    %200 = vmatpush1.msra.mxu0 0.0
    %201 = vmatprep.subr.mxu0 0.0
    %202 = vmatpush1.msra.mxu0 0.0
    %203 = vmatprep.subr.mxu0 0.0
    %204 = vmatpush1.msra.mxu0 0.0
    %205 = vmatprep.subr.mxu0 0.0
    %206 = vmatpush1.msra.mxu0 0.0
    %207 = vmatprep.subr.mxu0 0.0
    %208 = vmatpush1.msra.mxu0 0.0
    %209 = vmatprep.subr.mxu0 0.0
    %210 = vmatpush1.msra.mxu0 0.0
    %211 = vmatprep.subr.mxu0 0.0
    %212 = vmatpush1.msra.mxu0 0.0
    %213 = vmatprep.subr.mxu0 0.0
    %214 = vmatpush1.msra.mxu0 0.0
    %215 = vmatprep.subr.mxu0 0.0
    %216 = vmatpush1.msra.mxu0 0.0
    %217 = vmatprep.subr.mxu0 0.0
    %218 = vmatpush1.msra.mxu0 0.0
    %219 = vmatprep.subr.mxu0 0.0
    %220 = vmatpush1.msra.mxu0 0.0
    %221 = vmatprep.subr.mxu0 0.0
    %222 = vmatpush1.msra.mxu0 0.0
    %223 = vmatprep.subr.mxu0 0.0
    %224 = vmatpush1.msra.mxu0 0.0
    %225 = vmatprep.subr.mxu0 0.0
    %226 = vmatpush1.msra.mxu0 0.0
    %227 = vmatprep.subr.mxu0 0.0
    %228 = vmatpush1.msra.mxu0 0.0
    %229 = vmatprep.subr.mxu0 0.0
    %230 = vmatpush1.msra.mxu0 0.0
    %231 = vmatprep.subr.mxu0 0.0
    %232 = vmatpush1.msra.mxu0 0.0
    %233 = vmatprep.subr.mxu0 0.0
    %234 = vmatpush1.msra.mxu0 0.0
    %235 = vmatprep.subr.mxu0 0.0
    %236 = vmatpush1.msra.mxu0 0.0
    %237 = vmatprep.subr.mxu0 0.0
    %238 = vmatpush1.msra.mxu0 0.0
    %239 = vmatprep.subr.mxu0 0.0
    %240 = vmatpush1.msra.mxu0 0.0
    %241 = vmatprep.subr.mxu0 0.0
    %242 = vmatpush1.msra.mxu0 0.0
    %243 = vmatprep.subr.mxu0 0.0
    %244 = vmatpush1.msra.mxu0 0.0
    %245 = vmatprep.subr.mxu0 0.0
    %246 = vmatpush1.msra.mxu0 0.0
    %247 = vmatprep.subr.mxu0 0.0
    %248 = vmatpush1.msra.mxu0 0.0
    %249 = vmatprep.subr.mxu0 0.0
    %250 = vmatpush1.msra.mxu0 0.0
    %251 = vmatprep.subr.mxu0 0.0
    %252 = vmatpush1.msra.mxu0 0.0
    %253 = vmatprep.subr.mxu0 0.0
    %254 = vmatpush1.msra.mxu0 0.0
    %255 = vmatprep.mubr.f32.mxu0 0.0
    %256 = vmatmul.mubr.f32.gmra.mrb[0].mxu0 %v183
    %v257 = vpop.f32.mrb[0].mxu0
    %v258 = vadd.f32 %v165, %v257
    %v259 = vpop.f32.mrb[0].mxu0
    %260 = vmatprep.mubr.f32.mxu0 0.0
    %261 = vmatmul.mubr.f32.gmra.mrb[0].mxu0 %v185
    %v262 = vpop.f32.mrb[0].mxu0
    %v263 = vadd.f32 %v170, %v262
    %v264 = vpop.f32.mrb[0].mxu0
    %265 = vmatprep.mubr.f32.mxu0 0.0
    %266 = vmatmul.mubr.f32.gmra.mrb[0].mxu0 %v187
    %v267 = vpop.f32.mrb[0].mxu0
    %v268 = vadd.f32 %v175, %v267
    %v269 = vpop.f32.mrb[0].mxu0
    %270 = vmatprep.mubr.f32.mxu0 0.0
    %271 = vmatmul.mubr.f32.gmra.mrb[0].mxu0 %v189
    %v272 = vpop.f32.mrb[0].mxu0
    %v273 = vadd.f32 %v180, %v272
    %v274 = vpop.f32.mrb[0].mxu0
    %275 = vdwg.mxu0
    %v276 = vmax.f32 %v258, 0.0
    %v277 = vmax.f32 %v263, 0.0
    %v278 = vmax.f32 %v268, 0.0
    %v279 = vmax.f32 %v273, 0.0
    %s280 = scalar_lea.vmem [#allocation5], 64
    %v281 = vld [vmem:[%s280] sm:$0xff]
    %v282 = vld [vmem:[%s280 + $0x8] sm:$0xff]
    %v283 = vld [vmem:[%s280 + $0x10] sm:$0xff]
    %v284 = vld [vmem:[%s280 + $0x18] sm:$0xff]
    %286 = vset.pattern.permute.xlu0 32
    %287 = vperm.xlu0 %286, %v281
    %v288 = vpop.permute.xlu0 %287
    %291 = vset.pattern.permute.xlu0 32
    %292 = vperm.xlu0 %291, %v282
    %v293 = vpop.permute.xlu0 %292
    %296 = vset.pattern.permute.xlu0 32
    %297 = vperm.xlu0 %296, %v283
    %v298 = vpop.permute.xlu0 %297
    %301 = vset.pattern.permute.xlu0 32
    %302 = vperm.xlu0 %301, %v284
    %v303 = vpop.permute.xlu0 %302
    %v305 = vsel %vm182, %v281, 0
    %v307 = vsel %vm182, %v282, 0
    %v309 = vsel %vm182, %v283, 0
    %v311 = vsel %vm182, %v284, 0
    %313 = vmatprep.subr.mxu0 0.0
    %314 = vmatpush1.msra.mxu0 %v276
    %315 = vmatprep.subr.mxu0 0.0
    %316 = vmatpush1.msra.mxu0 %v277
    %317 = vmatprep.subr.mxu0 0.0
    %318 = vmatpush1.msra.mxu0 %v278
    %319 = vmatprep.subr.mxu0 0.0
    %320 = vmatpush1.msra.mxu0 %v279
    %321 = vmatprep.subr.mxu0 0.0
    %322 = vmatpush1.msra.mxu0 0.0
    %323 = vmatprep.subr.mxu0 0.0
    %324 = vmatpush1.msra.mxu0 0.0
    %325 = vmatprep.subr.mxu0 0.0
    %326 = vmatpush1.msra.mxu0 0.0
    %327 = vmatprep.subr.mxu0 0.0
    %328 = vmatpush1.msra.mxu0 0.0
    %329 = vmatprep.subr.mxu0 0.0
    %330 = vmatpush1.msra.mxu0 0.0
    %331 = vmatprep.subr.mxu0 0.0
    %332 = vmatpush1.msra.mxu0 0.0
    %333 = vmatprep.subr.mxu0 0.0
    %334 = vmatpush1.msra.mxu0 0.0
    %335 = vmatprep.subr.mxu0 0.0
    %336 = vmatpush1.msra.mxu0 0.0
    %337 = vmatprep.subr.mxu0 0.0
    %338 = vmatpush1.msra.mxu0 0.0
    %339 = vmatprep.subr.mxu0 0.0
    %340 = vmatpush1.msra.mxu0 0.0
    %341 = vmatprep.subr.mxu0 0.0
    %342 = vmatpush1.msra.mxu0 0.0
    %343 = vmatprep.subr.mxu0 0.0
    %344 = vmatpush1.msra.mxu0 0.0
    %345 = vmatprep.subr.mxu0 0.0
    %346 = vmatpush1.msra.mxu0 0.0
    %347 = vmatprep.subr.mxu0 0.0
    %348 = vmatpush1.msra.mxu0 0.0
    %349 = vmatprep.subr.mxu0 0.0
    %350 = vmatpush1.msra.mxu0 0.0
    %351 = vmatprep.subr.mxu0 0.0
    %352 = vmatpush1.msra.mxu0 0.0
    %353 = vmatprep.subr.mxu0 0.0
    %354 = vmatpush1.msra.mxu0 0.0
    %355 = vmatprep.subr.mxu0 0.0
    %356 = vmatpush1.msra.mxu0 0.0
    %357 = vmatprep.subr.mxu0 0.0
    %358 = vmatpush1.msra.mxu0 0.0
    %359 = vmatprep.subr.mxu0 0.0
    %360 = vmatpush1.msra.mxu0 0.0
    %361 = vmatprep.subr.mxu0 0.0
    %362 = vmatpush1.msra.mxu0 0.0
    %363 = vmatprep.subr.mxu0 0.0
    %364 = vmatpush1.msra.mxu0 0.0
    %365 = vmatprep.subr.mxu0 0.0
    %366 = vmatpush1.msra.mxu0 0.0
    %367 = vmatprep.subr.mxu0 0.0
    %368 = vmatpush1.msra.mxu0 0.0
    %369 = vmatprep.subr.mxu0 0.0
    %370 = vmatpush1.msra.mxu0 0.0
    %371 = vmatprep.subr.mxu0 0.0
    %372 = vmatpush1.msra.mxu0 0.0
    %373 = vmatprep.subr.mxu0 0.0
    %374 = vmatpush1.msra.mxu0 0.0
    %375 = vmatprep.subr.mxu0 0.0
    %376 = vmatpush1.msra.mxu0 0.0
    %377 = vmatprep.mubr.f32.mxu0 0.0
    %378 = vmatmul.mubr.f32.gmra.mrb[0].mxu0 %v305
    %v379 = vpop.f32.mrb[0].mxu0
    %v380 = vadd.f32 %v288, %v379
    %v381 = vpop.f32.mrb[0].mxu0
    %382 = vmatprep.mubr.f32.mxu0 0.0
    %383 = vmatmul.mubr.f32.gmra.mrb[0].mxu0 %v307
    %v384 = vpop.f32.mrb[0].mxu0
    %v385 = vadd.f32 %v293, %v384
    %v386 = vpop.f32.mrb[0].mxu0
    %387 = vmatprep.mubr.f32.mxu0 0.0
    %388 = vmatmul.mubr.f32.gmra.mrb[0].mxu0 %v309
    %v389 = vpop.f32.mrb[0].mxu0
    %v390 = vadd.f32 %v298, %v389
    %v391 = vpop.f32.mrb[0].mxu0
    %392 = vmatprep.mubr.f32.mxu0 0.0
    %393 = vmatmul.mubr.f32.gmra.mrb[0].mxu0 %v311
    %v394 = vpop.f32.mrb[0].mxu0
    %v395 = vadd.f32 %v303, %v394
    %v396 = vpop.f32.mrb[0].mxu0
    %397 = vdwg.mxu0
    %v398 = vmax.f32 %v380, 0.0
    %v399 = vmax.f32 %v385, 0.0
    %v400 = vmax.f32 %v390, 0.0
    %v401 = vmax.f32 %v395, 0.0
    %s402 = scalar_lea.vmem [#allocation5], 96
    %v403 = vld [vmem:[%s402] sm:$0xff]
    %v404 = vld [vmem:[%s402 + $0x8] sm:$0xff]
    %v405 = vld [vmem:[%s402 + $0x10] sm:$0xff]
    %v406 = vld [vmem:[%s402 + $0x18] sm:$0xff]
    %408 = vset.pattern.permute.xlu0 0
    %409 = vperm.xlu0 %408, %v403
    %v410 = vpop.permute.xlu0 %409
    %413 = vset.pattern.permute.xlu0 0
    %414 = vperm.xlu0 %413, %v404
    %v415 = vpop.permute.xlu0 %414
    %418 = vset.pattern.permute.xlu0 0
    %419 = vperm.xlu0 %418, %v405
    %v420 = vpop.permute.xlu0 %419
    %423 = vset.pattern.permute.xlu0 0
    %424 = vperm.xlu0 %423, %v406
    %v425 = vpop.permute.xlu0 %424
    %v427 = vmul.f32 %v410, %v398
    %v428 = vmul.f32 %v415, %v399
    %v429 = vmul.f32 %v420, %v400
    %v430 = vmul.f32 %v425, %v401
    %v431 = vadd.f32 %v427, %v428
    %v432 = vadd.f32 %v431, %v429
    %v433 = vadd.f32 %v432, %v430
    %v434 = vrot.slane %v433, 4
    %v435 = vadd.f32 %v433, %v434
    %v436 = vrot.slane %v435, 2
    %v437 = vadd.f32 %v435, %v436
    %v438 = vrot.slane %v437, 1
    %v439 = vadd.f32 %v437, %v438
    %v440 = vld [vmem:[%s402] sm:$0x1]
    %442 = vset.pattern.permute.xlu0 32
    %443 = vperm.xlu0 %442, %v440
    %v444 = vpop.permute.xlu0 %443
    %v446 = vadd.f32 %v439, %v444
    %447 = vst [vmem:[#allocation7] sm:$0x1] %v446
    // Predicated region
    $region22: #{tpu_custom_call.1} parent=1 // pred_check
      _
    $region23: #{tpu_custom_call.1} parent=1 // pred_check_branch
      %449 = sbr.rel (0) target = $region25
    $region24: #{tpu_custom_call.1} parent=1 // pred_region
      %s451 = ssub.s32 16, 16
      %452 = vsyncadd [#allocation4], %s451
      %s454 = sshll.u32 [#allocation7], 4
      %s455 = int_to_ptr.vmem [resolvable:$true] %s454
      %457 = dma.vmem_to_hbm [thread:$0]  %s455, 16, %s3, [#allocation4]
    $region25: #{tpu_custom_call.1} parent=1 // pred_fallthru
      _
    // Predicated region
    $region26: #{tpu_custom_call.1} parent=1 // pred_check
      _
    $region27: #{tpu_custom_call.1} parent=1 // pred_check_branch
      %459 = sbr.rel (0) target = $region29
    $region28: #{tpu_custom_call.1} parent=1 // pred_region
      %460 = dma.done [#allocation4], 16
    $region29: #{tpu_custom_call.1} parent=1 // pred_fallthru
      _
    %461 = vsyncpa [#allocation3], 1
    %462 = vsyncpa [#allocation6], 1
    %463 = vsyncpa [#allocation4], 1

</llo_original>
